<compile_context>
chip_gen: v7x
topology: tpu7x:2x2x1
jax: 0.10.0
libtpu: 0.0.40
codegen_flags: <defaults>
</compile_context>

<pallas_src>
import functools

import jax
import jax.numpy as jnp
import numpy as np
from jax.experimental import pallas as pl
from jax.experimental.pallas import tpu as pltpu

S_SIZE = 24
H_SIZE = 128
H3_SIZE = H_SIZE // 2   # fc3 width (64)
A_SIZE = 4              # action width


def policy_mlp_kernel(x_ref,
                      w1_ref, b1_ref,
                      w2_ref, b2_ref,
                      w3_ref, b3_ref,
                      w4_ref, b4_ref,
                      o_ref):
    """One batch block: (TB, 24) -> (TB, 4)."""
    x = x_ref[...]                                                     # (TB, 24)

    h1 = jnp.dot(x, w1_ref[...], preferred_element_type=jnp.float32) + b1_ref[...]
    h1 = jnp.maximum(h1, 0.0)                                          # (TB, 128)

    h2 = jnp.dot(h1, w2_ref[...], preferred_element_type=jnp.float32) + b2_ref[...]
    h2 = jnp.maximum(h2, 0.0)                                          # (TB, 128)

    h3 = jnp.dot(h2, w3_ref[...], preferred_element_type=jnp.float32) + b3_ref[...]
    h3 = jnp.maximum(h3, 0.0)                                          # (TB, 64)

    h4 = jnp.dot(h3, w4_ref[...], preferred_element_type=jnp.float32) + b4_ref[...]
    o_ref[...] = jnp.tanh(h4)                                          # (TB, 4)


def _round_up(n, m):
    return ((n + m - 1) // m) * m


@functools.partial(jax.jit, static_argnames=("block_b",))
def policy_forward(x, params, *, block_b=2048):
    """x: (B, s_size) f32; params: dict of (in,out) weights / (1,out) biases."""
    B = x.shape[0]

    # Block count: >=2 blocks whenever possible so both v7x TensorCores run;
    # for large batches use ~block_b-row tiles.  Tile size is derived from the
    # block count (not the other way round) to keep batch padding minimal.
    if B <= block_b:
        num_blocks = 1 if B <= 8 else 2
    else:
        num_blocks = pl.cdiv(B, block_b)
    TB = _round_up(pl.cdiv(B, num_blocks), 8)
    Bp = num_blocks * TB

    # Only pad the ragged batch tail (zero rows are harmless, sliced away).
    x_p = x if Bp == B else jnp.pad(x, ((0, Bp - B), (0, 0)))

    w1, b1 = params["w1"], params["b1"]                  # (24,128),  (1,128)
    w2, b2 = params["w2"], params["b2"]                  # (128,128), (1,128)
    w3, b3 = params["w3"], params["b3"]                  # (128,64),  (1,64)
    w4, b4 = params["w4"], params["b4"]                  # (64,4),    (1,4)

    x_spec = pl.BlockSpec((TB, S_SIZE), lambda i: (i, 0))
    out_spec = pl.BlockSpec((TB, A_SIZE), lambda i: (i, 0))

    def const_spec(shape):
        # Same block every grid step -> weights/biases stay VMEM-resident.
        return pl.BlockSpec(shape, lambda i: (0, 0))

    flops = 2 * Bp * (S_SIZE * H_SIZE + H_SIZE * H_SIZE
                      + H_SIZE * H3_SIZE + H3_SIZE * A_SIZE)
    bytes_accessed = 4 * (Bp * S_SIZE + Bp * A_SIZE
                          + S_SIZE * H_SIZE + H_SIZE
                          + H_SIZE * H_SIZE + H_SIZE
                          + H_SIZE * H3_SIZE + H3_SIZE
                          + H3_SIZE * A_SIZE + A_SIZE)
    cost = pl.CostEstimate(flops=flops,
                           transcendentals=Bp * A_SIZE,
                           bytes_accessed=bytes_accessed)

    # TODO(synk): optional bf16 weight/activation path (MXU 2x) omitted because
    # it would not meet the 1e-5 correctness tolerance vs. the f32 reference.
    out = pl.pallas_call(
        policy_mlp_kernel,
        out_shape=jax.ShapeDtypeStruct((Bp, A_SIZE), jnp.float32),
        grid=(num_blocks,),
        in_specs=[
            x_spec,
            const_spec((S_SIZE, H_SIZE)),  const_spec((1, H_SIZE)),
            const_spec((H_SIZE, H_SIZE)),  const_spec((1, H_SIZE)),
            const_spec((H_SIZE, H3_SIZE)), const_spec((1, H3_SIZE)),
            const_spec((H3_SIZE, A_SIZE)), const_spec((1, A_SIZE)),
        ],
        out_specs=out_spec,
        compiler_params=pltpu.CompilerParams(
            dimension_semantics=("parallel",),
            vmem_limit_bytes=32 * 1024 * 1024),
        cost_estimate=cost,
    )(x_p, w1, b1, w2, b2, w3, b3, w4, b4)

    return out if Bp == B else out[:B]


def init_policy_params(key, s_size=S_SIZE, h_size=H_SIZE, a_size=A_SIZE):
    """Deterministic init mimicking nn.Linear's U(-1/sqrt(fan_in), 1/sqrt(fan_in)).

    Weights are stored as (in_features, out_features), i.e. already transposed
    relative to PyTorch's (out, in) layout. Biases are (1, out_features).
    """
    dims = [(s_size, h_size), (h_size, h_size), (h_size, h_size // 2),
            (h_size // 2, a_size)]
    params = {}
    for i, (fan_in, fan_out) in enumerate(dims, start=1):
        key, kw, kb = jax.random.split(key, 3)
        bound = 1.0 / np.sqrt(fan_in)
        params[f"w{i}"] = jax.random.uniform(
            kw, (fan_in, fan_out), jnp.float32, -bound, bound)
        params[f"b{i}"] = jax.random.uniform(
            kb, (1, fan_out), jnp.float32, -bound, bound)
    return params


def policy_forward_ref(x, params):
    """Plain-JAX reference for correctness checking."""
    h = jnp.maximum(x @ params["w1"] + params["b1"], 0.0)
    h = jnp.maximum(h @ params["w2"] + params["b2"], 0.0)
    h = jnp.maximum(h @ params["w3"] + params["b3"], 0.0)
    return jnp.tanh(h @ params["w4"] + params["b4"])


if __name__ == "__main__":
    key = jax.random.PRNGKey(0)
    key, kx = jax.random.split(key)

    batch = 8
    x = jax.random.normal(kx, (batch, S_SIZE), dtype=jnp.float32)
    params = init_policy_params(key)

    out = policy_forward(x, params)
    out = jax.block_until_ready(out)

    ref = policy_forward_ref(x, params)
    np.testing.assert_allclose(np.asarray(out), np.asarray(ref),
                               rtol=1e-5, atol=1e-5)
    assert out.shape == (batch, A_SIZE) and out.dtype == jnp.float32

    # Two-block, ragged batch (exercises the padded-tail / 2-TC path).
    key, kx2 = jax.random.split(key)
    x_mid = jax.random.normal(kx2, (1000, S_SIZE), dtype=jnp.float32)
    out_mid = jax.block_until_ready(policy_forward(x_mid, params))
    ref_mid = policy_forward_ref(x_mid, params)
    np.testing.assert_allclose(np.asarray(out_mid), np.asarray(ref_mid),
                               rtol=1e-5, atol=1e-5)

    # Multi-block path with B > block_b (small block_b keeps the test fast).
    key, kx3 = jax.random.split(key)
    x_big = jax.random.normal(kx3, (1300, S_SIZE), dtype=jnp.float32)
    out_big = jax.block_until_ready(policy_forward(x_big, params, block_b=512))
    ref_big = policy_forward_ref(x_big, params)
    np.testing.assert_allclose(np.asarray(out_big), np.asarray(ref_big),
                               rtol=1e-5, atol=1e-5)

    print("KERNEL_OK")
</pallas_src>

<mosaic_0001>
module attributes {stable_mosaic.version = 11 : i64} {
  func.func @policy_mlp_kernel(%arg0: i32, %arg1: memref<8x24xf32, #tpu.memory_space<vmem>>, %arg2: memref<24x128xf32, #tpu.memory_space<vmem>>, %arg3: memref<1x128xf32, #tpu.memory_space<vmem>>, %arg4: memref<128x128xf32, #tpu.memory_space<vmem>>, %arg5: memref<1x128xf32, #tpu.memory_space<vmem>>, %arg6: memref<128x64xf32, #tpu.memory_space<vmem>>, %arg7: memref<1x64xf32, #tpu.memory_space<vmem>>, %arg8: memref<64x4xf32, #tpu.memory_space<vmem>>, %arg9: memref<1x4xf32, #tpu.memory_space<vmem>>, %arg10: memref<8x4xf32, #tpu.memory_space<vmem>>) attributes {dimension_semantics = [#tpu.dimension_semantics<parallel>], iteration_bounds = array<i64: 1>, scalar_prefetch = 0 : i64, scratch_operands = 0 : i64, tpu.core_type = #tpu.core_type<tc>, window_params = [{transform_indices = @transform_0, window_bounds = array<i64: 8, 24>}, {pipeline_mode = #tpu.pipeline_mode<synchronous>, transform_indices = @transform_1, window_bounds = array<i64: 24, 128>}, {pipeline_mode = #tpu.pipeline_mode<synchronous>, transform_indices = @transform_2, window_bounds = array<i64: 1, 128>}, {pipeline_mode = #tpu.pipeline_mode<synchronous>, transform_indices = @transform_3, window_bounds = array<i64: 128, 128>}, {pipeline_mode = #tpu.pipeline_mode<synchronous>, transform_indices = @transform_4, window_bounds = array<i64: 1, 128>}, {pipeline_mode = #tpu.pipeline_mode<synchronous>, transform_indices = @transform_5, window_bounds = array<i64: 128, 64>}, {pipeline_mode = #tpu.pipeline_mode<synchronous>, transform_indices = @transform_6, window_bounds = array<i64: 1, 64>}, {pipeline_mode = #tpu.pipeline_mode<synchronous>, transform_indices = @transform_7, window_bounds = array<i64: 64, 4>}, {pipeline_mode = #tpu.pipeline_mode<synchronous>, transform_indices = @transform_8, window_bounds = array<i64: 1, 4>}, {transform_indices = @transform_9, window_bounds = array<i64: 8, 4>}]} {
    %c0 = arith.constant 0 : index
    %c0_0 = arith.constant 0 : index
    %0 = vector.load %arg1[%c0, %c0_0] : memref<8x24xf32, #tpu.memory_space<vmem>>, vector<8x24xf32>
    %c0_1 = arith.constant 0 : index
    %c0_2 = arith.constant 0 : index
    %1 = vector.load %arg2[%c0_1, %c0_2] : memref<24x128xf32, #tpu.memory_space<vmem>>, vector<24x128xf32>
    %cst = arith.constant dense<0.000000e+00> : vector<8x128xf32>
    %2 = tpu.matmul %0, %1, %cst {dimension_numbers = #tpu.dot_dimension_numbers<[1], [0], [0], [1], [0, 0, 1, 1], [], []>} : vector<8x24xf32>, vector<24x128xf32>, vector<8x128xf32> -> vector<8x128xf32>
    %c0_3 = arith.constant 0 : index
    %c0_4 = arith.constant 0 : index
    %3 = vector.load %arg3[%c0_3, %c0_4] : memref<1x128xf32, #tpu.memory_space<vmem>>, vector<1x128xf32>
    %4 = vector.broadcast %3 : vector<1x128xf32> to vector<8x128xf32>
    %5 = arith.addf %2, %4 : vector<8x128xf32>
    %cst_5 = arith.constant 0.000000e+00 : f32
    %6 = vector.broadcast %cst_5 : f32 to vector<8x128xf32>
    %7 = arith.maximumf %5, %6 : vector<8x128xf32>
    %c0_6 = arith.constant 0 : index
    %c0_7 = arith.constant 0 : index
    %8 = vector.load %arg4[%c0_6, %c0_7] : memref<128x128xf32, #tpu.memory_space<vmem>>, vector<128x128xf32>
    %cst_8 = arith.constant dense<0.000000e+00> : vector<8x128xf32>
    %9 = tpu.matmul %7, %8, %cst_8 {dimension_numbers = #tpu.dot_dimension_numbers<[1], [0], [0], [1], [0, 0, 1, 1], [], []>} : vector<8x128xf32>, vector<128x128xf32>, vector<8x128xf32> -> vector<8x128xf32>
    %c0_9 = arith.constant 0 : index
    %c0_10 = arith.constant 0 : index
    %10 = vector.load %arg5[%c0_9, %c0_10] : memref<1x128xf32, #tpu.memory_space<vmem>>, vector<1x128xf32>
    %11 = vector.broadcast %10 : vector<1x128xf32> to vector<8x128xf32>
    %12 = arith.addf %9, %11 : vector<8x128xf32>
    %cst_11 = arith.constant 0.000000e+00 : f32
    %13 = vector.broadcast %cst_11 : f32 to vector<8x128xf32>
    %14 = arith.maximumf %12, %13 : vector<8x128xf32>
    %c0_12 = arith.constant 0 : index
    %c0_13 = arith.constant 0 : index
    %15 = vector.load %arg6[%c0_12, %c0_13] : memref<128x64xf32, #tpu.memory_space<vmem>>, vector<128x64xf32>
    %cst_14 = arith.constant dense<0.000000e+00> : vector<8x64xf32>
    %16 = tpu.matmul %14, %15, %cst_14 {dimension_numbers = #tpu.dot_dimension_numbers<[1], [0], [0], [1], [0, 0, 1, 1], [], []>} : vector<8x128xf32>, vector<128x64xf32>, vector<8x64xf32> -> vector<8x64xf32>
    %c0_15 = arith.constant 0 : index
    %c0_16 = arith.constant 0 : index
    %17 = vector.load %arg7[%c0_15, %c0_16] : memref<1x64xf32, #tpu.memory_space<vmem>>, vector<1x64xf32>
    %18 = vector.broadcast %17 : vector<1x64xf32> to vector<8x64xf32>
    %19 = arith.addf %16, %18 : vector<8x64xf32>
    %cst_17 = arith.constant 0.000000e+00 : f32
    %20 = vector.broadcast %cst_17 : f32 to vector<8x64xf32>
    %21 = arith.maximumf %19, %20 : vector<8x64xf32>
    %c0_18 = arith.constant 0 : index
    %c0_19 = arith.constant 0 : index
    %22 = vector.load %arg8[%c0_18, %c0_19] : memref<64x4xf32, #tpu.memory_space<vmem>>, vector<64x4xf32>
    %cst_20 = arith.constant dense<0.000000e+00> : vector<8x4xf32>
    %23 = tpu.matmul %21, %22, %cst_20 {dimension_numbers = #tpu.dot_dimension_numbers<[1], [0], [0], [1], [0, 0, 1, 1], [], []>} : vector<8x64xf32>, vector<64x4xf32>, vector<8x4xf32> -> vector<8x4xf32>
    %c0_21 = arith.constant 0 : index
    %c0_22 = arith.constant 0 : index
    %24 = vector.load %arg9[%c0_21, %c0_22] : memref<1x4xf32, #tpu.memory_space<vmem>>, vector<1x4xf32>
    %25 = vector.broadcast %24 : vector<1x4xf32> to vector<8x4xf32>
    %26 = arith.addf %23, %25 : vector<8x4xf32>
    %27 = math.tanh %26 : vector<8x4xf32>
    %c0_23 = arith.constant 0 : index
    %c0_24 = arith.constant 0 : index
    %28 = vector.load %arg10[%c0_23, %c0_24] : memref<8x4xf32, #tpu.memory_space<vmem>>, vector<8x4xf32>
    tpu.vector_store %arg10[%c0_23, %c0_24], %27 {strides = array<i32>} : memref<8x4xf32, #tpu.memory_space<vmem>>, vector<8x4xf32>,
    return
  }
  func.func @transform_0(%arg0: i32) -> (i32, i32) {
    %c0_i32 = arith.constant 0 : i32
    %c0_i32_0 = arith.constant 0 : i32
    return %arg0, %c0_i32 : i32, i32
  }
  func.func @transform_1(%arg0: i32) -> (i32, i32) {
    %c0_i32 = arith.constant 0 : i32
    %c0_i32_0 = arith.constant 0 : i32
    %c0_i32_1 = arith.constant 0 : i32
    return %c0_i32, %c0_i32_0 : i32, i32
  }
  func.func @transform_2(%arg0: i32) -> (i32, i32) {
    %c0_i32 = arith.constant 0 : i32
    %c0_i32_0 = arith.constant 0 : i32
    %c0_i32_1 = arith.constant 0 : i32
    return %c0_i32, %c0_i32_0 : i32, i32
  }
  func.func @transform_3(%arg0: i32) -> (i32, i32) {
    %c0_i32 = arith.constant 0 : i32
    %c0_i32_0 = arith.constant 0 : i32
    %c0_i32_1 = arith.constant 0 : i32
    return %c0_i32, %c0_i32_0 : i32, i32
  }
  func.func @transform_4(%arg0: i32) -> (i32, i32) {
    %c0_i32 = arith.constant 0 : i32
    %c0_i32_0 = arith.constant 0 : i32
    %c0_i32_1 = arith.constant 0 : i32
    return %c0_i32, %c0_i32_0 : i32, i32
  }
  func.func @transform_5(%arg0: i32) -> (i32, i32) {
    %c0_i32 = arith.constant 0 : i32
    %c0_i32_0 = arith.constant 0 : i32
    %c0_i32_1 = arith.constant 0 : i32
    return %c0_i32, %c0_i32_0 : i32, i32
  }
  func.func @transform_6(%arg0: i32) -> (i32, i32) {
    %c0_i32 = arith.constant 0 : i32
    %c0_i32_0 = arith.constant 0 : i32
    %c0_i32_1 = arith.constant 0 : i32
    return %c0_i32, %c0_i32_0 : i32, i32
  }
  func.func @transform_7(%arg0: i32) -> (i32, i32) {
    %c0_i32 = arith.constant 0 : i32
    %c0_i32_0 = arith.constant 0 : i32
    %c0_i32_1 = arith.constant 0 : i32
    return %c0_i32, %c0_i32_0 : i32, i32
  }
  func.func @transform_8(%arg0: i32) -> (i32, i32) {
    %c0_i32 = arith.constant 0 : i32
    %c0_i32_0 = arith.constant 0 : i32
    %c0_i32_1 = arith.constant 0 : i32
    return %c0_i32, %c0_i32_0 : i32, i32
  }
  func.func @transform_9(%arg0: i32) -> (i32, i32) {
    %c0_i32 = arith.constant 0 : i32
    %c0_i32_0 = arith.constant 0 : i32
    return %arg0, %c0_i32 : i32, i32
  }
}

</mosaic_0001>

<llo_original>
// kernel: policy_forward.1
$region0: #{policy_forward.1}
  #allocation0 [shape = 'u32[]', space=smem, size = 0x4, offset = 0x4, fixed_abs, tag = 'smem constant byte address 0x4 - core index']
  #allocation1 [shape = 'u32[144,128]{1,0:T(1,128)}', space=vmem, size = 0x12000, scoped, tag = 'internal scratch']
  %s0 = inlined_call_operand.vmem [shape: f32[8,24], index: 0, kind: input, shape index: {}]
  %s1 = inlined_call_operand.vmem [shape: f32[24,128], index: 1, kind: input, shape index: {}]
  %s2 = inlined_call_operand.vmem [shape: f32[1,128], index: 2, kind: input, shape index: {}]
  %s3 = inlined_call_operand.vmem [shape: f32[128,128], index: 3, kind: input, shape index: {}]
  %s4 = inlined_call_operand.vmem [shape: f32[1,128], index: 4, kind: input, shape index: {}]
  %s5 = inlined_call_operand.vmem [shape: f32[128,64], index: 5, kind: input, shape index: {}]
  %s6 = inlined_call_operand.vmem [shape: f32[1,64], index: 6, kind: input, shape index: {}]
  %s7 = inlined_call_operand.vmem [shape: f32[64,4], index: 7, kind: input, shape index: {}]
  %s8 = inlined_call_operand.vmem [shape: f32[1,4], index: 8, kind: input, shape index: {}]
  %s9 = inlined_call_operand.vmem [shape: f32[8,4], index: 9, kind: output, shape index: {}]
  %s10 = sld [smem:[#allocation0]]
  $region46: #{policy_forward.1} parent=0
    _
  %s12 = ssub.s32 1, %s10
  %s13 = scalar_select 0, %s12, %s10
  // Predicated region
  $region2: #{policy_forward.1} parent=0 // pred_check
    _
  $region3: #{policy_forward.1} parent=0 // pred_check_branch
    %15 = sbr.rel (0) target = $region5
  $region4: #{policy_forward.1} parent=0 // pred_region
    _
  $region5: #{policy_forward.1} parent=0 // pred_fallthru
    _
  // Predicated region
  $region6: #{policy_forward.1} parent=0 // pred_check
    _
  $region7: #{policy_forward.1} parent=0 // pred_check_branch
    %17 = sbr.rel (0) target = $region9
  $region8: #{policy_forward.1} parent=0 // pred_region
    _
  $region9: #{policy_forward.1} parent=0 // pred_fallthru
    _
  // Predicated region
  $region10: #{policy_forward.1} parent=0 // pred_check
    _
  $region11: #{policy_forward.1} parent=0 // pred_check_branch
    %19 = sbr.rel (0) target = $region13
  $region12: #{policy_forward.1} parent=0 // pred_region
    _
  $region13: #{policy_forward.1} parent=0 // pred_fallthru
    _
  // Predicated region
  $region14: #{policy_forward.1} parent=0 // pred_check
    _
  $region15: #{policy_forward.1} parent=0 // pred_check_branch
    %21 = sbr.rel (0) target = $region17
  $region16: #{policy_forward.1} parent=0 // pred_region
    _
  $region17: #{policy_forward.1} parent=0 // pred_fallthru
    _
  // Predicated region
  $region18: #{policy_forward.1} parent=0 // pred_check
    _
  $region19: #{policy_forward.1} parent=0 // pred_check_branch
    %23 = sbr.rel (0) target = $region21
  $region20: #{policy_forward.1} parent=0 // pred_region
    _
  $region21: #{policy_forward.1} parent=0 // pred_fallthru
    _
  // Predicated region
  $region22: #{policy_forward.1} parent=0 // pred_check
    _
  $region23: #{policy_forward.1} parent=0 // pred_check_branch
    %25 = sbr.rel (0) target = $region25
  $region24: #{policy_forward.1} parent=0 // pred_region
    _
  $region25: #{policy_forward.1} parent=0 // pred_fallthru
    _
  // Predicated region
  $region26: #{policy_forward.1} parent=0 // pred_check
    _
  $region27: #{policy_forward.1} parent=0 // pred_check_branch
    %27 = sbr.rel (0) target = $region29
  $region28: #{policy_forward.1} parent=0 // pred_region
    _
  $region29: #{policy_forward.1} parent=0 // pred_fallthru
    _
  // Predicated region
  $region30: #{policy_forward.1} parent=0 // pred_check
    _
  $region31: #{policy_forward.1} parent=0 // pred_check_branch
    %29 = sbr.rel (0) target = $region33
  $region32: #{policy_forward.1} parent=0 // pred_region
    _
  $region33: #{policy_forward.1} parent=0 // pred_fallthru
    _
  // Predicated region
  $region34: #{policy_forward.1} parent=0 // pred_check
    _
  $region35: #{policy_forward.1} parent=0 // pred_check_branch
    %31 = sbr.rel (0) target = $region37
  $region36: #{policy_forward.1} parent=0 // pred_region
    _
  $region37: #{policy_forward.1} parent=0 // pred_fallthru
    _
  %v32 = vld [vmem:[%s0] sm:$0xff]
  %v33 = vld [vmem:[%s1] sm:$0xff]
  %v34 = vld [vmem:[%s1 + $0x8] sm:$0xff]
  %v35 = vld [vmem:[%s1 + $0x10] sm:$0xff]
  %v36 = vld [vmem:[%s2] sm:$0x1]
  %v38 = vlaneseq
  %v39 = vshrl.u32 %v38, 7
  %v40 = vsub.s32 0, %v39
  %v41 = vrot.slane %v36, %v40
  %vm43 = vcmask 195584
  %v45 = vsel %vm43, %v32, 0
  %47 = vmatprep.subr.mxu0 0.0
  %48 = vmatpush1.msra.mxu0 %v33
  %49 = vmatprep.subr.mxu0 0.0
  %50 = vmatpush1.msra.mxu0 %v34
  %51 = vmatprep.subr.mxu0 0.0
  %52 = vmatpush1.msra.mxu0 %v35
  %53 = vmatprep.subr.mxu0 0.0
  %54 = vmatpush1.msra.mxu0 0.0
  %55 = vmatprep.subr.mxu0 0.0
  %56 = vmatpush1.msra.mxu0 0.0
  %57 = vmatprep.subr.mxu0 0.0
  %58 = vmatpush1.msra.mxu0 0.0
  %59 = vmatprep.subr.mxu0 0.0
  %60 = vmatpush1.msra.mxu0 0.0
  %61 = vmatprep.subr.mxu0 0.0
  %62 = vmatpush1.msra.mxu0 0.0
  %63 = vmatprep.subr.mxu0 0.0
  %64 = vmatpush1.msra.mxu0 0.0
  %65 = vmatprep.subr.mxu0 0.0
  %66 = vmatpush1.msra.mxu0 0.0
  %67 = vmatprep.subr.mxu0 0.0
  %68 = vmatpush1.msra.mxu0 0.0
  %69 = vmatprep.subr.mxu0 0.0
  %70 = vmatpush1.msra.mxu0 0.0
  %71 = vmatprep.subr.mxu0 0.0
  %72 = vmatpush1.msra.mxu0 0.0
  %73 = vmatprep.subr.mxu0 0.0
  %74 = vmatpush1.msra.mxu0 0.0
  %75 = vmatprep.subr.mxu0 0.0
  %76 = vmatpush1.msra.mxu0 0.0
  %77 = vmatprep.subr.mxu0 0.0
  %78 = vmatpush1.msra.mxu0 0.0
  %79 = vmatprep.subr.mxu0 0.0
  %80 = vmatpush1.msra.mxu0 0.0
  %81 = vmatprep.subr.mxu0 0.0
  %82 = vmatpush1.msra.mxu0 0.0
  %83 = vmatprep.subr.mxu0 0.0
  %84 = vmatpush1.msra.mxu0 0.0
  %85 = vmatprep.subr.mxu0 0.0
  %86 = vmatpush1.msra.mxu0 0.0
  %87 = vmatprep.subr.mxu0 0.0
  %88 = vmatpush1.msra.mxu0 0.0
  %89 = vmatprep.subr.mxu0 0.0
  %90 = vmatpush1.msra.mxu0 0.0
  %91 = vmatprep.subr.mxu0 0.0
  %92 = vmatpush1.msra.mxu0 0.0
  %93 = vmatprep.subr.mxu0 0.0
  %94 = vmatpush1.msra.mxu0 0.0
  %95 = vmatprep.subr.mxu0 0.0
  %96 = vmatpush1.msra.mxu0 0.0
  %97 = vmatprep.subr.mxu0 0.0
  %98 = vmatpush1.msra.mxu0 0.0
  %99 = vmatprep.subr.mxu0 0.0
  %100 = vmatpush1.msra.mxu0 0.0
  %101 = vmatprep.subr.mxu0 0.0
  %102 = vmatpush1.msra.mxu0 0.0
  %103 = vmatprep.subr.mxu0 0.0
  %104 = vmatpush1.msra.mxu0 0.0
  %105 = vmatprep.subr.mxu0 0.0
  %106 = vmatpush1.msra.mxu0 0.0
  %107 = vmatprep.subr.mxu0 0.0
  %108 = vmatpush1.msra.mxu0 0.0
  %109 = vmatprep.subr.mxu0 0.0
  %110 = vmatpush1.msra.mxu0 0.0
  %111 = vmatprep.mubr.f32.mxu0 0.0
  %112 = vmatmul.mubr.f32.gmra.mrb[0].mxu0 %v45
  %v113 = vpop.f32.mrb[0].mxu0
  %v114 = vadd.f32 %v41, %v113
  %v115 = vpop.f32.mrb[0].mxu0
  %116 = vdwg.mxu0
  %v117 = vmax.f32 %v114, 0.0
  %v118 = vld [vmem:[%s3] sm:$0xff]
  %v119 = vld [vmem:[%s3 + $0x8] sm:$0xff]
  %v120 = vld [vmem:[%s3 + $0x10] sm:$0xff]
  %v121 = vld [vmem:[%s3 + $0x18] sm:$0xff]
  %v122 = vld [vmem:[%s3 + $0x20] sm:$0xff]
  %v123 = vld [vmem:[%s3 + $0x28] sm:$0xff]
  %v124 = vld [vmem:[%s3 + $0x30] sm:$0xff]
  %v125 = vld [vmem:[%s3 + $0x38] sm:$0xff]
  %v126 = vld [vmem:[%s3 + $0x40] sm:$0xff]
  %v127 = vld [vmem:[%s3 + $0x48] sm:$0xff]
  %v128 = vld [vmem:[%s3 + $0x50] sm:$0xff]
  %v129 = vld [vmem:[%s3 + $0x58] sm:$0xff]
  %v130 = vld [vmem:[%s3 + $0x60] sm:$0xff]
  %v131 = vld [vmem:[%s3 + $0x68] sm:$0xff]
  %v132 = vld [vmem:[%s3 + $0x70] sm:$0xff]
  %v133 = vld [vmem:[%s3 + $0x78] sm:$0xff]
  %v134 = vld [vmem:[%s4] sm:$0x1]
  %v136 = vlaneseq
  %v137 = vshrl.u32 %v136, 7
  %v138 = vsub.s32 0, %v137
  %v139 = vrot.slane %v134, %v138
  %141 = vmatprep.subr.mxu0 0.0
  %142 = vmatpush1.msra.mxu0 %v118
  %143 = vmatprep.subr.mxu0 0.0
  %144 = vmatpush1.msra.mxu0 %v119
  %145 = vmatprep.subr.mxu0 0.0
  %146 = vmatpush1.msra.mxu0 %v120
  %147 = vmatprep.subr.mxu0 0.0
  %148 = vmatpush1.msra.mxu0 %v121
  %149 = vmatprep.subr.mxu0 0.0
  %150 = vmatpush1.msra.mxu0 %v122
  %151 = vmatprep.subr.mxu0 0.0
  %152 = vmatpush1.msra.mxu0 %v123
  %153 = vmatprep.subr.mxu0 0.0
  %154 = vmatpush1.msra.mxu0 %v124
  %155 = vmatprep.subr.mxu0 0.0
  %156 = vmatpush1.msra.mxu0 %v125
  %157 = vmatprep.subr.mxu0 0.0
  %158 = vmatpush1.msra.mxu0 %v126
  %159 = vmatprep.subr.mxu0 0.0
  %160 = vmatpush1.msra.mxu0 %v127
  %161 = vmatprep.subr.mxu0 0.0
  %162 = vmatpush1.msra.mxu0 %v128
  %163 = vmatprep.subr.mxu0 0.0
  %164 = vmatpush1.msra.mxu0 %v129
  %165 = vmatprep.subr.mxu0 0.0
  %166 = vmatpush1.msra.mxu0 %v130
  %167 = vmatprep.subr.mxu0 0.0
  %168 = vmatpush1.msra.mxu0 %v131
  %169 = vmatprep.subr.mxu0 0.0
  %170 = vmatpush1.msra.mxu0 %v132
  %171 = vmatprep.subr.mxu0 0.0
  %172 = vmatpush1.msra.mxu0 %v133
  %173 = vmatprep.subr.mxu0 0.0
  %174 = vmatpush1.msra.mxu0 0.0
  %175 = vmatprep.subr.mxu0 0.0
  %176 = vmatpush1.msra.mxu0 0.0
  %177 = vmatprep.subr.mxu0 0.0
  %178 = vmatpush1.msra.mxu0 0.0
  %179 = vmatprep.subr.mxu0 0.0
  %180 = vmatpush1.msra.mxu0 0.0
  %181 = vmatprep.subr.mxu0 0.0
  %182 = vmatpush1.msra.mxu0 0.0
  %183 = vmatprep.subr.mxu0 0.0
  %184 = vmatpush1.msra.mxu0 0.0
  %185 = vmatprep.subr.mxu0 0.0
  %186 = vmatpush1.msra.mxu0 0.0
  %187 = vmatprep.subr.mxu0 0.0
  %188 = vmatpush1.msra.mxu0 0.0
  %189 = vmatprep.subr.mxu0 0.0
  %190 = vmatpush1.msra.mxu0 0.0
  %191 = vmatprep.subr.mxu0 0.0
  %192 = vmatpush1.msra.mxu0 0.0
  %193 = vmatprep.subr.mxu0 0.0
  %194 = vmatpush1.msra.mxu0 0.0
  %195 = vmatprep.subr.mxu0 0.0
  %196 = vmatpush1.msra.mxu0 0.0
  %197 = vmatprep.subr.mxu0 0.0
  %198 = vmatpush1.msra.mxu0 0.0
  %199 = vmatprep.subr.mxu0 0.0
  %200 = vmatpush1.msra.mxu0 0.0
  %201 = vmatprep.subr.mxu0 0.0
  %202 = vmatpush1.msra.mxu0 0.0
  %203 = vmatprep.subr.mxu0 0.0
  %204 = vmatpush1.msra.mxu0 0.0
  %205 = vmatprep.mubr.f32.mxu0 0.0
  %206 = vmatmul.mubr.f32.gmra.mrb[0].mxu0 %v117
  %v207 = vpop.f32.mrb[0].mxu0
  %v208 = vadd.f32 %v139, %v207
  %v209 = vpop.f32.mrb[0].mxu0
  %210 = vdwg.mxu0
  %v211 = vmax.f32 %v208, 0.0
  %v212 = vld [vmem:[%s5] sm:$0xff]
  %v213 = vld [vmem:[%s5 + $0x8] sm:$0xff]
  %v214 = vld [vmem:[%s5 + $0x10] sm:$0xff]
  %v215 = vld [vmem:[%s5 + $0x18] sm:$0xff]
  %v216 = vld [vmem:[%s5 + $0x20] sm:$0xff]
  %v217 = vld [vmem:[%s5 + $0x28] sm:$0xff]
  %v218 = vld [vmem:[%s5 + $0x30] sm:$0xff]
  %v219 = vld [vmem:[%s5 + $0x38] sm:$0xff]
  %v220 = vld [vmem:[%s5 + $0x40] sm:$0xff]
  %v221 = vld [vmem:[%s5 + $0x48] sm:$0xff]
  %v222 = vld [vmem:[%s5 + $0x50] sm:$0xff]
  %v223 = vld [vmem:[%s5 + $0x58] sm:$0xff]
  %v224 = vld [vmem:[%s5 + $0x60] sm:$0xff]
  %v225 = vld [vmem:[%s5 + $0x68] sm:$0xff]
  %v226 = vld [vmem:[%s5 + $0x70] sm:$0xff]
  %v227 = vld [vmem:[%s5 + $0x78] sm:$0xff]
  %v228 = vld [vmem:[%s6] sm:$0x1]
  %v230 = vlaneseq
  %v231 = vshrl.u32 %v230, 7
  %v232 = vsub.s32 0, %v231
  %v233 = vrot.slane %v228, %v232
  %235 = vmatprep.subr.mxu0 0.0
  %236 = vmatpush1.msra.mxu0 %v212
  %237 = vmatprep.subr.mxu0 0.0
  %238 = vmatpush1.msra.mxu0 %v213
  %239 = vmatprep.subr.mxu0 0.0
  %240 = vmatpush1.msra.mxu0 %v214
  %241 = vmatprep.subr.mxu0 0.0
  %242 = vmatpush1.msra.mxu0 %v215
  %243 = vmatprep.subr.mxu0 0.0
  %244 = vmatpush1.msra.mxu0 %v216
  %245 = vmatprep.subr.mxu0 0.0
  %246 = vmatpush1.msra.mxu0 %v217
  %247 = vmatprep.subr.mxu0 0.0
  %248 = vmatpush1.msra.mxu0 %v218
  %249 = vmatprep.subr.mxu0 0.0
  %250 = vmatpush1.msra.mxu0 %v219
  %251 = vmatprep.subr.mxu0 0.0
  %252 = vmatpush1.msra.mxu0 %v220
  %253 = vmatprep.subr.mxu0 0.0
  %254 = vmatpush1.msra.mxu0 %v221
  %255 = vmatprep.subr.mxu0 0.0
  %256 = vmatpush1.msra.mxu0 %v222
  %257 = vmatprep.subr.mxu0 0.0
  %258 = vmatpush1.msra.mxu0 %v223
  %259 = vmatprep.subr.mxu0 0.0
  %260 = vmatpush1.msra.mxu0 %v224
  %261 = vmatprep.subr.mxu0 0.0
  %262 = vmatpush1.msra.mxu0 %v225
  %263 = vmatprep.subr.mxu0 0.0
  %264 = vmatpush1.msra.mxu0 %v226
  %265 = vmatprep.subr.mxu0 0.0
  %266 = vmatpush1.msra.mxu0 %v227
  %267 = vmatprep.subr.mxu0 0.0
  %268 = vmatpush1.msra.mxu0 0.0
  %269 = vmatprep.subr.mxu0 0.0
  %270 = vmatpush1.msra.mxu0 0.0
  %271 = vmatprep.subr.mxu0 0.0
  %272 = vmatpush1.msra.mxu0 0.0
  %273 = vmatprep.subr.mxu0 0.0
  %274 = vmatpush1.msra.mxu0 0.0
  %275 = vmatprep.subr.mxu0 0.0
  %276 = vmatpush1.msra.mxu0 0.0
  %277 = vmatprep.subr.mxu0 0.0
  %278 = vmatpush1.msra.mxu0 0.0
  %279 = vmatprep.subr.mxu0 0.0
  %280 = vmatpush1.msra.mxu0 0.0
  %281 = vmatprep.subr.mxu0 0.0
  %282 = vmatpush1.msra.mxu0 0.0
  %283 = vmatprep.subr.mxu0 0.0
  %284 = vmatpush1.msra.mxu0 0.0
  %285 = vmatprep.subr.mxu0 0.0
  %286 = vmatpush1.msra.mxu0 0.0
  %287 = vmatprep.subr.mxu0 0.0
  %288 = vmatpush1.msra.mxu0 0.0
  %289 = vmatprep.subr.mxu0 0.0
  %290 = vmatpush1.msra.mxu0 0.0
  %291 = vmatprep.subr.mxu0 0.0
  %292 = vmatpush1.msra.mxu0 0.0
  %293 = vmatprep.subr.mxu0 0.0
  %294 = vmatpush1.msra.mxu0 0.0
  %295 = vmatprep.subr.mxu0 0.0
  %296 = vmatpush1.msra.mxu0 0.0
  %297 = vmatprep.subr.mxu0 0.0
  %298 = vmatpush1.msra.mxu0 0.0
  %299 = vmatprep.mubr.f32.mxu0 0.0
  %300 = vmatmul.mubr.f32.gmra.mrb[0].mxu0 %v211
  %v301 = vpop.f32.mrb[0].mxu0
  %v302 = vadd.f32 %v233, %v301
  %v303 = vpop.f32.mrb[0].mxu0
  %304 = vdwg.mxu0
  %v305 = vmax.f32 %v302, 0.0
  %v306 = vld [vmem:[%s7] sm:$0xff]
  %v307 = vld [vmem:[%s7 + $0x8] sm:$0xff]
  %v308 = vld [vmem:[%s7 + $0x10] sm:$0xff]
  %v309 = vld [vmem:[%s7 + $0x18] sm:$0xff]
  %v310 = vld [vmem:[%s7 + $0x20] sm:$0xff]
  %v311 = vld [vmem:[%s7 + $0x28] sm:$0xff]
  %v312 = vld [vmem:[%s7 + $0x30] sm:$0xff]
  %v313 = vld [vmem:[%s7 + $0x38] sm:$0xff]
  %v314 = vld [vmem:[%s8] sm:$0x1]
  %v316 = vlaneseq
  %v317 = vshrl.u32 %v316, 7
  %v318 = vsub.s32 0, %v317
  %v319 = vrot.slane %v314, %v318
  %vm321 = vcmask 523264
  %v323 = vsel %vm321, %v305, 0
  %325 = vmatprep.subr.mxu0 0.0
  %326 = vmatpush1.msra.mxu0 %v306
  %327 = vmatprep.subr.mxu0 0.0
  %328 = vmatpush1.msra.mxu0 %v307
  %329 = vmatprep.subr.mxu0 0.0
  %330 = vmatpush1.msra.mxu0 %v308
  %331 = vmatprep.subr.mxu0 0.0
  %332 = vmatpush1.msra.mxu0 %v309
  %333 = vmatprep.subr.mxu0 0.0
  %334 = vmatpush1.msra.mxu0 %v310
  %335 = vmatprep.subr.mxu0 0.0
  %336 = vmatpush1.msra.mxu0 %v311
  %337 = vmatprep.subr.mxu0 0.0
  %338 = vmatpush1.msra.mxu0 %v312
  %339 = vmatprep.subr.mxu0 0.0
  %340 = vmatpush1.msra.mxu0 %v313
  %341 = vmatprep.subr.mxu0 0.0
  %342 = vmatpush1.msra.mxu0 0.0
  %343 = vmatprep.subr.mxu0 0.0
  %344 = vmatpush1.msra.mxu0 0.0
  %345 = vmatprep.subr.mxu0 0.0
  %346 = vmatpush1.msra.mxu0 0.0
  %347 = vmatprep.subr.mxu0 0.0
  %348 = vmatpush1.msra.mxu0 0.0
  %349 = vmatprep.subr.mxu0 0.0
  %350 = vmatpush1.msra.mxu0 0.0
  %351 = vmatprep.subr.mxu0 0.0
  %352 = vmatpush1.msra.mxu0 0.0
  %353 = vmatprep.subr.mxu0 0.0
  %354 = vmatpush1.msra.mxu0 0.0
  %355 = vmatprep.subr.mxu0 0.0
  %356 = vmatpush1.msra.mxu0 0.0
  %357 = vmatprep.subr.mxu0 0.0
  %358 = vmatpush1.msra.mxu0 0.0
  %359 = vmatprep.subr.mxu0 0.0
  %360 = vmatpush1.msra.mxu0 0.0
  %361 = vmatprep.subr.mxu0 0.0
  %362 = vmatpush1.msra.mxu0 0.0
  %363 = vmatprep.subr.mxu0 0.0
  %364 = vmatpush1.msra.mxu0 0.0
  %365 = vmatprep.subr.mxu0 0.0
  %366 = vmatpush1.msra.mxu0 0.0
  %367 = vmatprep.subr.mxu0 0.0
  %368 = vmatpush1.msra.mxu0 0.0
  %369 = vmatprep.subr.mxu0 0.0
  %370 = vmatpush1.msra.mxu0 0.0
  %371 = vmatprep.subr.mxu0 0.0
  %372 = vmatpush1.msra.mxu0 0.0
  %373 = vmatprep.subr.mxu0 0.0
  %374 = vmatpush1.msra.mxu0 0.0
  %375 = vmatprep.subr.mxu0 0.0
  %376 = vmatpush1.msra.mxu0 0.0
  %377 = vmatprep.subr.mxu0 0.0
  %378 = vmatpush1.msra.mxu0 0.0
  %379 = vmatprep.subr.mxu0 0.0
  %380 = vmatpush1.msra.mxu0 0.0
  %381 = vmatprep.subr.mxu0 0.0
  %382 = vmatpush1.msra.mxu0 0.0
  %383 = vmatprep.subr.mxu0 0.0
  %384 = vmatpush1.msra.mxu0 0.0
  %385 = vmatprep.subr.mxu0 0.0
  %386 = vmatpush1.msra.mxu0 0.0
  %387 = vmatprep.subr.mxu0 0.0
  %388 = vmatpush1.msra.mxu0 0.0
  %389 = vmatprep.mubr.f32.mxu0 0.0
  %390 = vmatmul.mubr.f32.gmra.mrb[0].mxu0 %v323
  %v391 = vpop.f32.mrb[0].mxu0
  %v392 = vadd.f32 %v319, %v391
  %v393 = vpop.f32.mrb[0].mxu0
  %394 = vdwg.mxu0
  %v395 = vtanh.pop %v392
  %vm396 = vcmask 31744
  %397 = vst.msk [vmem:[%s9] sm:$0xff] %vm396, %v395
  // Predicated region
  $region38: #{policy_forward.1} parent=0 // pred_check
    _
  $region39: #{policy_forward.1} parent=0 // pred_check_branch
    %399 = sbr.rel (0) target = $region41
  $region40: #{policy_forward.1} parent=0 // pred_region
    _
  $region41: #{policy_forward.1} parent=0 // pred_fallthru
    _
  // Predicated region
  $region42: #{policy_forward.1} parent=0 // pred_check
    _
  $region43: #{policy_forward.1} parent=0 // pred_check_branch
    %401 = sbr.rel (0) target = $region45
  $region44: #{policy_forward.1} parent=0 // pred_region
    _
  $region45: #{policy_forward.1} parent=0 // pred_fallthru
    _

</llo_original>
